<compile_context>
chip_gen: v5e
topology: v5e:2x2
jax: 0.10.0
libtpu: 0.0.40
codegen_flags: <defaults>
</compile_context>

<pallas_src>
import functools

import jax
import jax.numpy as jnp
import numpy as np
from jax.experimental import pallas as pl
from jax.experimental.pallas import tpu as pltpu


def _attention_lstm_kernel(x_ref, wih_ref, whh_ref, b_ref, wfc_ref, bfc_ref,
                           out_ref, *, batch, seq_len, hidden):
    """Whole forward pass in VMEM (single block, no grid; shapes are tiny)."""
    B, T, H = batch, seq_len, hidden

    # ---- hoisted input projection: one GEMM for all timesteps (+ bias) ----
    # gx: (T*B, 4H), gate column order [i | f | o | g]
    gx = (jnp.dot(x_ref[...], wih_ref[...],
                  preferred_element_type=jnp.float32) + b_ref[...])

    whh = whh_ref[...]                       # (H, 4H), load once

    # ---- recurrence: h/c live in registers, loop fully unrolled ----
    h = jnp.zeros((B, H), jnp.float32)
    c = jnp.zeros((B, H), jnp.float32)
    outs = []
    for t in range(T):                       # T is static & small -> unroll
        gates = gx[t * B:(t + 1) * B, :] + jnp.dot(
            h, whh, preferred_element_type=jnp.float32)        # (B, 4H)
        sig = jax.nn.sigmoid(gates[:, :3 * H])                  # [i | f | o]
        g = jnp.tanh(gates[:, 3 * H:])
        i_g = sig[:, 0 * H:1 * H]
        f_g = sig[:, 1 * H:2 * H]
        o_g = sig[:, 2 * H:3 * H]
        c = f_g * c + i_g * g
        h = o_g * jnp.tanh(c)
        outs.append(h)

    # ---- attention over timesteps (softmax over T), register-resident ----
    h_final = h                                                  # (B, H)
    scores = [jnp.sum(outs[t] * h_final, axis=1, keepdims=True)  # (B, 1) each
              for t in range(T)]
    m = scores[0]
    for t in range(1, T):
        m = jnp.maximum(m, scores[t])
    exps = [jnp.exp(s - m) for s in scores]
    denom = exps[0]
    for t in range(1, T):
        denom = denom + exps[t]
    ctx = exps[0] * outs[0]
    for t in range(1, T):
        ctx = ctx + exps[t] * outs[t]
    ctx = ctx / denom                                            # (B, H)

    # TODO(synk): dropout is identity here (inference semantics; no RNG mask).

    # ---- fc1 + log_softmax (dim=1) ----
    logits = (jnp.dot(ctx, wfc_ref[...],
                      preferred_element_type=jnp.float32) + bfc_ref[...])  # (B, O)
    lmax = jnp.max(logits, axis=1, keepdims=True)
    lse = jnp.log(jnp.sum(jnp.exp(logits - lmax), axis=1, keepdims=True)) + lmax
    out_ref[...] = logits - lse


def _permute_gate_cols(a):
    """Columns in PyTorch gate order [i, f, g, o] -> kernel order [i, f, o, g]."""
    i, f, g, o = jnp.split(a, 4, axis=-1)
    return jnp.concatenate([i, f, o, g], axis=-1)


@jax.jit
def attention_lstm_forward(x_bte, w_ih, w_hh, b_ih, b_hh, w_fc, b_fc):
    """x_bte: (B, T, E) batch_first, PyTorch-style.  Returns (B, O) log-probs."""
    B, T, E = x_bte.shape
    H = w_hh.shape[1]
    O = w_fc.shape[0]

    # time-major, flattened rows (T*B, E) for the hoisted input-projection GEMM
    x_flat = jnp.transpose(x_bte, (1, 0, 2)).reshape(T * B, E).astype(jnp.float32)
    wih_t = _permute_gate_cols(jnp.transpose(w_ih).astype(jnp.float32))   # (E, 4H)
    whh_t = _permute_gate_cols(jnp.transpose(w_hh).astype(jnp.float32))   # (H, 4H)
    bias = _permute_gate_cols(
        (b_ih + b_hh).reshape(1, 4 * H).astype(jnp.float32))              # (1, 4H)
    wfc_t = jnp.transpose(w_fc).astype(jnp.float32)                       # (H, O)
    bfc = b_fc.reshape(1, O).astype(jnp.float32)                          # (1, O)

    kernel = functools.partial(_attention_lstm_kernel,
                               batch=B, seq_len=T, hidden=H)
    vmem = pl.BlockSpec(memory_space=pltpu.MemorySpace.VMEM)
    return pl.pallas_call(
        kernel,
        out_shape=jax.ShapeDtypeStruct((B, O), jnp.float32),
        in_specs=[vmem] * 6,
        out_specs=vmem,
    )(x_flat, wih_t, whh_t, bias, wfc_t, bfc)


def _reference_forward(x, w_ih, w_hh, b_ih, b_hh, w_fc, b_fc):
    """Pure-JAX reference mirroring the PyTorch module (original gate order)."""
    B, T, E = x.shape
    H = w_hh.shape[1]
    h = jnp.zeros((B, H), jnp.float32)
    c = jnp.zeros((B, H), jnp.float32)
    outs = []
    for t in range(T):
        g = x[:, t, :] @ w_ih.T + b_ih + h @ w_hh.T + b_hh
        i, f, gg, o = jnp.split(g, 4, axis=1)
        i, f, o = jax.nn.sigmoid(i), jax.nn.sigmoid(f), jax.nn.sigmoid(o)
        gg = jnp.tanh(gg)
        c = f * c + i * gg
        h = o * jnp.tanh(c)
        outs.append(h)
    out_seq = jnp.stack(outs, axis=1)                             # (B, T, H)
    scores = jnp.einsum('bth,bh->bt', out_seq, h)
    w = jax.nn.softmax(scores, axis=1)
    ctx = jnp.einsum('bth,bt->bh', out_seq, w)
    logits = ctx @ w_fc.T + b_fc
    return jax.nn.log_softmax(logits, axis=1)


if __name__ == "__main__":
    B, T, E, H, O = 2, 8, 32, 32, 2

    key = jax.random.PRNGKey(0)
    ks = jax.random.split(key, 7)
    bound = 1.0 / np.sqrt(H)
    w_ih = jax.random.uniform(ks[0], (4 * H, E), jnp.float32, -bound, bound)
    w_hh = jax.random.uniform(ks[1], (4 * H, H), jnp.float32, -bound, bound)
    b_ih = jax.random.uniform(ks[2], (4 * H,), jnp.float32, -bound, bound)
    b_hh = jax.random.uniform(ks[3], (4 * H,), jnp.float32, -bound, bound)
    w_fc = jax.random.uniform(ks[4], (O, H), jnp.float32, -bound, bound)
    b_fc = jax.random.uniform(ks[5], (O,), jnp.float32, -bound, bound)
    x = jax.random.normal(ks[6], (B, T, E), jnp.float32)

    out = attention_lstm_forward(x, w_ih, w_hh, b_ih, b_hh, w_fc, b_fc)
    out = jax.block_until_ready(out)

    ref = _reference_forward(x, w_ih, w_hh, b_ih, b_hh, w_fc, b_fc)
    np.testing.assert_allclose(np.asarray(out), np.asarray(ref),
                               rtol=1e-4, atol=1e-4)
    print("KERNEL_OK")
</pallas_src>

<mosaic_0001>
module attributes {stable_mosaic.version = 11 : i64} {
  func.func @_attention_lstm_kernel(%arg0: memref<16x32xf32, #tpu.memory_space<vmem>>, %arg1: memref<32x128xf32, #tpu.memory_space<vmem>>, %arg2: memref<32x128xf32, #tpu.memory_space<vmem>>, %arg3: memref<1x128xf32, #tpu.memory_space<vmem>>, %arg4: memref<32x2xf32, #tpu.memory_space<vmem>>, %arg5: memref<1x2xf32, #tpu.memory_space<vmem>>, %arg6: memref<2x2xf32, #tpu.memory_space<vmem>>) attributes {dimension_semantics = [], scalar_prefetch = 0 : i64, scratch_operands = 0 : i64, tpu.core_type = #tpu.core_type<tc>} {
    %c0 = arith.constant 0 : index
    %c0_0 = arith.constant 0 : index
    %0 = vector.load %arg0[%c0, %c0_0] : memref<16x32xf32, #tpu.memory_space<vmem>>, vector<16x32xf32>
    %c0_1 = arith.constant 0 : index
    %c0_2 = arith.constant 0 : index
    %1 = vector.load %arg1[%c0_1, %c0_2] : memref<32x128xf32, #tpu.memory_space<vmem>>, vector<32x128xf32>
    %cst = arith.constant dense<0.000000e+00> : vector<16x128xf32>
    %2 = tpu.matmul %0, %1, %cst {dimension_numbers = #tpu.dot_dimension_numbers<[1], [0], [0], [1], [0, 0, 1, 1], [], []>} : vector<16x32xf32>, vector<32x128xf32>, vector<16x128xf32> -> vector<16x128xf32>
    %c0_3 = arith.constant 0 : index
    %c0_4 = arith.constant 0 : index
    %3 = vector.load %arg3[%c0_3, %c0_4] : memref<1x128xf32, #tpu.memory_space<vmem>>, vector<1x128xf32>
    %4 = vector.broadcast %3 : vector<1x128xf32> to vector<16x128xf32>
    %5 = arith.addf %2, %4 : vector<16x128xf32>
    %c0_5 = arith.constant 0 : index
    %c0_6 = arith.constant 0 : index
    %6 = vector.load %arg2[%c0_5, %c0_6] : memref<32x128xf32, #tpu.memory_space<vmem>>, vector<32x128xf32>
    %cst_7 = arith.constant 0.000000e+00 : f32
    %7 = vector.broadcast %cst_7 : f32 to vector<2x32xf32>
    %cst_8 = arith.constant 0.000000e+00 : f32
    %8 = vector.broadcast %cst_8 : f32 to vector<2x32xf32>
    %9 = vector.extract_strided_slice %5 {offsets = [0, 0], sizes = [2, 128], strides = [1, 1]} : vector<16x128xf32> to vector<2x128xf32>
    %cst_9 = arith.constant dense<0.000000e+00> : vector<2x128xf32>
    %10 = tpu.matmul %7, %6, %cst_9 {dimension_numbers = #tpu.dot_dimension_numbers<[1], [0], [0], [1], [0, 0, 1, 1], [], []>} : vector<2x32xf32>, vector<32x128xf32>, vector<2x128xf32> -> vector<2x128xf32>
    %11 = arith.addf %9, %10 : vector<2x128xf32>
    %12 = vector.extract_strided_slice %11 {offsets = [0, 0], sizes = [2, 96], strides = [1, 1]} : vector<2x128xf32> to vector<2x96xf32>
    %13 = arith.negf %12 : vector<2x96xf32>
    %14 = math.exp %13 : vector<2x96xf32>
    %cst_10 = arith.constant 1.000000e+00 : f32
    %15 = vector.broadcast %cst_10 : f32 to vector<2x96xf32>
    %16 = arith.addf %15, %14 : vector<2x96xf32>
    %17 = arith.divf %15, %16 : vector<2x96xf32>
    %18 = vector.extract_strided_slice %11 {offsets = [0, 96], sizes = [2, 32], strides = [1, 1]} : vector<2x128xf32> to vector<2x32xf32>
    %19 = math.tanh %18 : vector<2x32xf32>
    %20 = vector.extract_strided_slice %17 {offsets = [0, 0], sizes = [2, 32], strides = [1, 1]} : vector<2x96xf32> to vector<2x32xf32>
    %21 = vector.extract_strided_slice %17 {offsets = [0, 32], sizes = [2, 32], strides = [1, 1]} : vector<2x96xf32> to vector<2x32xf32>
    %22 = vector.extract_strided_slice %17 {offsets = [0, 64], sizes = [2, 32], strides = [1, 1]} : vector<2x96xf32> to vector<2x32xf32>
    %23 = arith.mulf %21, %8 : vector<2x32xf32>
    %24 = arith.mulf %20, %19 : vector<2x32xf32>
    %25 = arith.addf %23, %24 : vector<2x32xf32>
    %26 = math.tanh %25 : vector<2x32xf32>
    %27 = arith.mulf %22, %26 : vector<2x32xf32>
    %28 = vector.extract_strided_slice %5 {offsets = [2, 0], sizes = [2, 128], strides = [1, 1]} : vector<16x128xf32> to vector<2x128xf32>
    %cst_11 = arith.constant dense<0.000000e+00> : vector<2x128xf32>
    %29 = tpu.matmul %27, %6, %cst_11 {dimension_numbers = #tpu.dot_dimension_numbers<[1], [0], [0], [1], [0, 0, 1, 1], [], []>} : vector<2x32xf32>, vector<32x128xf32>, vector<2x128xf32> -> vector<2x128xf32>
    %30 = arith.addf %28, %29 : vector<2x128xf32>
    %31 = vector.extract_strided_slice %30 {offsets = [0, 0], sizes = [2, 96], strides = [1, 1]} : vector<2x128xf32> to vector<2x96xf32>
    %32 = arith.negf %31 : vector<2x96xf32>
    %33 = math.exp %32 : vector<2x96xf32>
    %cst_12 = arith.constant 1.000000e+00 : f32
    %34 = vector.broadcast %cst_12 : f32 to vector<2x96xf32>
    %35 = arith.addf %34, %33 : vector<2x96xf32>
    %36 = arith.divf %34, %35 : vector<2x96xf32>
    %37 = vector.extract_strided_slice %30 {offsets = [0, 96], sizes = [2, 32], strides = [1, 1]} : vector<2x128xf32> to vector<2x32xf32>
    %38 = math.tanh %37 : vector<2x32xf32>
    %39 = vector.extract_strided_slice %36 {offsets = [0, 0], sizes = [2, 32], strides = [1, 1]} : vector<2x96xf32> to vector<2x32xf32>
    %40 = vector.extract_strided_slice %36 {offsets = [0, 32], sizes = [2, 32], strides = [1, 1]} : vector<2x96xf32> to vector<2x32xf32>
    %41 = vector.extract_strided_slice %36 {offsets = [0, 64], sizes = [2, 32], strides = [1, 1]} : vector<2x96xf32> to vector<2x32xf32>
    %42 = arith.mulf %40, %25 : vector<2x32xf32>
    %43 = arith.mulf %39, %38 : vector<2x32xf32>
    %44 = arith.addf %42, %43 : vector<2x32xf32>
    %45 = math.tanh %44 : vector<2x32xf32>
    %46 = arith.mulf %41, %45 : vector<2x32xf32>
    %47 = vector.extract_strided_slice %5 {offsets = [4, 0], sizes = [2, 128], strides = [1, 1]} : vector<16x128xf32> to vector<2x128xf32>
    %cst_13 = arith.constant dense<0.000000e+00> : vector<2x128xf32>
    %48 = tpu.matmul %46, %6, %cst_13 {dimension_numbers = #tpu.dot_dimension_numbers<[1], [0], [0], [1], [0, 0, 1, 1], [], []>} : vector<2x32xf32>, vector<32x128xf32>, vector<2x128xf32> -> vector<2x128xf32>
    %49 = arith.addf %47, %48 : vector<2x128xf32>
    %50 = vector.extract_strided_slice %49 {offsets = [0, 0], sizes = [2, 96], strides = [1, 1]} : vector<2x128xf32> to vector<2x96xf32>
    %51 = arith.negf %50 : vector<2x96xf32>
    %52 = math.exp %51 : vector<2x96xf32>
    %cst_14 = arith.constant 1.000000e+00 : f32
    %53 = vector.broadcast %cst_14 : f32 to vector<2x96xf32>
    %54 = arith.addf %53, %52 : vector<2x96xf32>
    %55 = arith.divf %53, %54 : vector<2x96xf32>
    %56 = vector.extract_strided_slice %49 {offsets = [0, 96], sizes = [2, 32], strides = [1, 1]} : vector<2x128xf32> to vector<2x32xf32>
    %57 = math.tanh %56 : vector<2x32xf32>
    %58 = vector.extract_strided_slice %55 {offsets = [0, 0], sizes = [2, 32], strides = [1, 1]} : vector<2x96xf32> to vector<2x32xf32>
    %59 = vector.extract_strided_slice %55 {offsets = [0, 32], sizes = [2, 32], strides = [1, 1]} : vector<2x96xf32> to vector<2x32xf32>
    %60 = vector.extract_strided_slice %55 {offsets = [0, 64], sizes = [2, 32], strides = [1, 1]} : vector<2x96xf32> to vector<2x32xf32>
    %61 = arith.mulf %59, %44 : vector<2x32xf32>
    %62 = arith.mulf %58, %57 : vector<2x32xf32>
    %63 = arith.addf %61, %62 : vector<2x32xf32>
    %64 = math.tanh %63 : vector<2x32xf32>
    %65 = arith.mulf %60, %64 : vector<2x32xf32>
    %66 = vector.extract_strided_slice %5 {offsets = [6, 0], sizes = [2, 128], strides = [1, 1]} : vector<16x128xf32> to vector<2x128xf32>
    %cst_15 = arith.constant dense<0.000000e+00> : vector<2x128xf32>
    %67 = tpu.matmul %65, %6, %cst_15 {dimension_numbers = #tpu.dot_dimension_numbers<[1], [0], [0], [1], [0, 0, 1, 1], [], []>} : vector<2x32xf32>, vector<32x128xf32>, vector<2x128xf32> -> vector<2x128xf32>
    %68 = arith.addf %66, %67 : vector<2x128xf32>
    %69 = vector.extract_strided_slice %68 {offsets = [0, 0], sizes = [2, 96], strides = [1, 1]} : vector<2x128xf32> to vector<2x96xf32>
    %70 = arith.negf %69 : vector<2x96xf32>
    %71 = math.exp %70 : vector<2x96xf32>
    %cst_16 = arith.constant 1.000000e+00 : f32
    %72 = vector.broadcast %cst_16 : f32 to vector<2x96xf32>
    %73 = arith.addf %72, %71 : vector<2x96xf32>
    %74 = arith.divf %72, %73 : vector<2x96xf32>
    %75 = vector.extract_strided_slice %68 {offsets = [0, 96], sizes = [2, 32], strides = [1, 1]} : vector<2x128xf32> to vector<2x32xf32>
    %76 = math.tanh %75 : vector<2x32xf32>
    %77 = vector.extract_strided_slice %74 {offsets = [0, 0], sizes = [2, 32], strides = [1, 1]} : vector<2x96xf32> to vector<2x32xf32>
    %78 = vector.extract_strided_slice %74 {offsets = [0, 32], sizes = [2, 32], strides = [1, 1]} : vector<2x96xf32> to vector<2x32xf32>
    %79 = vector.extract_strided_slice %74 {offsets = [0, 64], sizes = [2, 32], strides = [1, 1]} : vector<2x96xf32> to vector<2x32xf32>
    %80 = arith.mulf %78, %63 : vector<2x32xf32>
    %81 = arith.mulf %77, %76 : vector<2x32xf32>
    %82 = arith.addf %80, %81 : vector<2x32xf32>
    %83 = math.tanh %82 : vector<2x32xf32>
    %84 = arith.mulf %79, %83 : vector<2x32xf32>
    %85 = vector.extract_strided_slice %5 {offsets = [8, 0], sizes = [2, 128], strides = [1, 1]} : vector<16x128xf32> to vector<2x128xf32>
    %cst_17 = arith.constant dense<0.000000e+00> : vector<2x128xf32>
    %86 = tpu.matmul %84, %6, %cst_17 {dimension_numbers = #tpu.dot_dimension_numbers<[1], [0], [0], [1], [0, 0, 1, 1], [], []>} : vector<2x32xf32>, vector<32x128xf32>, vector<2x128xf32> -> vector<2x128xf32>
    %87 = arith.addf %85, %86 : vector<2x128xf32>
    %88 = vector.extract_strided_slice %87 {offsets = [0, 0], sizes = [2, 96], strides = [1, 1]} : vector<2x128xf32> to vector<2x96xf32>
    %89 = arith.negf %88 : vector<2x96xf32>
    %90 = math.exp %89 : vector<2x96xf32>
    %cst_18 = arith.constant 1.000000e+00 : f32
    %91 = vector.broadcast %cst_18 : f32 to vector<2x96xf32>
    %92 = arith.addf %91, %90 : vector<2x96xf32>
    %93 = arith.divf %91, %92 : vector<2x96xf32>
    %94 = vector.extract_strided_slice %87 {offsets = [0, 96], sizes = [2, 32], strides = [1, 1]} : vector<2x128xf32> to vector<2x32xf32>
    %95 = math.tanh %94 : vector<2x32xf32>
    %96 = vector.extract_strided_slice %93 {offsets = [0, 0], sizes = [2, 32], strides = [1, 1]} : vector<2x96xf32> to vector<2x32xf32>
    %97 = vector.extract_strided_slice %93 {offsets = [0, 32], sizes = [2, 32], strides = [1, 1]} : vector<2x96xf32> to vector<2x32xf32>
    %98 = vector.extract_strided_slice %93 {offsets = [0, 64], sizes = [2, 32], strides = [1, 1]} : vector<2x96xf32> to vector<2x32xf32>
    %99 = arith.mulf %97, %82 : vector<2x32xf32>
    %100 = arith.mulf %96, %95 : vector<2x32xf32>
    %101 = arith.addf %99, %100 : vector<2x32xf32>
    %102 = math.tanh %101 : vector<2x32xf32>
    %103 = arith.mulf %98, %102 : vector<2x32xf32>
    %104 = vector.extract_strided_slice %5 {offsets = [10, 0], sizes = [2, 128], strides = [1, 1]} : vector<16x128xf32> to vector<2x128xf32>
    %cst_19 = arith.constant dense<0.000000e+00> : vector<2x128xf32>
    %105 = tpu.matmul %103, %6, %cst_19 {dimension_numbers = #tpu.dot_dimension_numbers<[1], [0], [0], [1], [0, 0, 1, 1], [], []>} : vector<2x32xf32>, vector<32x128xf32>, vector<2x128xf32> -> vector<2x128xf32>
    %106 = arith.addf %104, %105 : vector<2x128xf32>
    %107 = vector.extract_strided_slice %106 {offsets = [0, 0], sizes = [2, 96], strides = [1, 1]} : vector<2x128xf32> to vector<2x96xf32>
    %108 = arith.negf %107 : vector<2x96xf32>
    %109 = math.exp %108 : vector<2x96xf32>
    %cst_20 = arith.constant 1.000000e+00 : f32
    %110 = vector.broadcast %cst_20 : f32 to vector<2x96xf32>
    %111 = arith.addf %110, %109 : vector<2x96xf32>
    %112 = arith.divf %110, %111 : vector<2x96xf32>
    %113 = vector.extract_strided_slice %106 {offsets = [0, 96], sizes = [2, 32], strides = [1, 1]} : vector<2x128xf32> to vector<2x32xf32>
    %114 = math.tanh %113 : vector<2x32xf32>
    %115 = vector.extract_strided_slice %112 {offsets = [0, 0], sizes = [2, 32], strides = [1, 1]} : vector<2x96xf32> to vector<2x32xf32>
    %116 = vector.extract_strided_slice %112 {offsets = [0, 32], sizes = [2, 32], strides = [1, 1]} : vector<2x96xf32> to vector<2x32xf32>
    %117 = vector.extract_strided_slice %112 {offsets = [0, 64], sizes = [2, 32], strides = [1, 1]} : vector<2x96xf32> to vector<2x32xf32>
    %118 = arith.mulf %116, %101 : vector<2x32xf32>
    %119 = arith.mulf %115, %114 : vector<2x32xf32>
    %120 = arith.addf %118, %119 : vector<2x32xf32>
    %121 = math.tanh %120 : vector<2x32xf32>
    %122 = arith.mulf %117, %121 : vector<2x32xf32>
    %123 = vector.extract_strided_slice %5 {offsets = [12, 0], sizes = [2, 128], strides = [1, 1]} : vector<16x128xf32> to vector<2x128xf32>
    %cst_21 = arith.constant dense<0.000000e+00> : vector<2x128xf32>
    %124 = tpu.matmul %122, %6, %cst_21 {dimension_numbers = #tpu.dot_dimension_numbers<[1], [0], [0], [1], [0, 0, 1, 1], [], []>} : vector<2x32xf32>, vector<32x128xf32>, vector<2x128xf32> -> vector<2x128xf32>
    %125 = arith.addf %123, %124 : vector<2x128xf32>
    %126 = vector.extract_strided_slice %125 {offsets = [0, 0], sizes = [2, 96], strides = [1, 1]} : vector<2x128xf32> to vector<2x96xf32>
    %127 = arith.negf %126 : vector<2x96xf32>
    %128 = math.exp %127 : vector<2x96xf32>
    %cst_22 = arith.constant 1.000000e+00 : f32
    %129 = vector.broadcast %cst_22 : f32 to vector<2x96xf32>
    %130 = arith.addf %129, %128 : vector<2x96xf32>
    %131 = arith.divf %129, %130 : vector<2x96xf32>
    %132 = vector.extract_strided_slice %125 {offsets = [0, 96], sizes = [2, 32], strides = [1, 1]} : vector<2x128xf32> to vector<2x32xf32>
    %133 = math.tanh %132 : vector<2x32xf32>
    %134 = vector.extract_strided_slice %131 {offsets = [0, 0], sizes = [2, 32], strides = [1, 1]} : vector<2x96xf32> to vector<2x32xf32>
    %135 = vector.extract_strided_slice %131 {offsets = [0, 32], sizes = [2, 32], strides = [1, 1]} : vector<2x96xf32> to vector<2x32xf32>
    %136 = vector.extract_strided_slice %131 {offsets = [0, 64], sizes = [2, 32], strides = [1, 1]} : vector<2x96xf32> to vector<2x32xf32>
    %137 = arith.mulf %135, %120 : vector<2x32xf32>
    %138 = arith.mulf %134, %133 : vector<2x32xf32>
    %139 = arith.addf %137, %138 : vector<2x32xf32>
    %140 = math.tanh %139 : vector<2x32xf32>
    %141 = arith.mulf %136, %140 : vector<2x32xf32>
    %142 = vector.extract_strided_slice %5 {offsets = [14, 0], sizes = [2, 128], strides = [1, 1]} : vector<16x128xf32> to vector<2x128xf32>
    %cst_23 = arith.constant dense<0.000000e+00> : vector<2x128xf32>
    %143 = tpu.matmul %141, %6, %cst_23 {dimension_numbers = #tpu.dot_dimension_numbers<[1], [0], [0], [1], [0, 0, 1, 1], [], []>} : vector<2x32xf32>, vector<32x128xf32>, vector<2x128xf32> -> vector<2x128xf32>
    %144 = arith.addf %142, %143 : vector<2x128xf32>
    %145 = vector.extract_strided_slice %144 {offsets = [0, 0], sizes = [2, 96], strides = [1, 1]} : vector<2x128xf32> to vector<2x96xf32>
    %146 = arith.negf %145 : vector<2x96xf32>
    %147 = math.exp %146 : vector<2x96xf32>
    %cst_24 = arith.constant 1.000000e+00 : f32
    %148 = vector.broadcast %cst_24 : f32 to vector<2x96xf32>
    %149 = arith.addf %148, %147 : vector<2x96xf32>
    %150 = arith.divf %148, %149 : vector<2x96xf32>
    %151 = vector.extract_strided_slice %144 {offsets = [0, 96], sizes = [2, 32], strides = [1, 1]} : vector<2x128xf32> to vector<2x32xf32>
    %152 = math.tanh %151 : vector<2x32xf32>
    %153 = vector.extract_strided_slice %150 {offsets = [0, 0], sizes = [2, 32], strides = [1, 1]} : vector<2x96xf32> to vector<2x32xf32>
    %154 = vector.extract_strided_slice %150 {offsets = [0, 32], sizes = [2, 32], strides = [1, 1]} : vector<2x96xf32> to vector<2x32xf32>
    %155 = vector.extract_strided_slice %150 {offsets = [0, 64], sizes = [2, 32], strides = [1, 1]} : vector<2x96xf32> to vector<2x32xf32>
    %156 = arith.mulf %154, %139 : vector<2x32xf32>
    %157 = arith.mulf %153, %152 : vector<2x32xf32>
    %158 = arith.addf %156, %157 : vector<2x32xf32>
    %159 = math.tanh %158 : vector<2x32xf32>
    %160 = arith.mulf %155, %159 : vector<2x32xf32>
    %161 = arith.mulf %27, %160 : vector<2x32xf32>
    %cst_25 = arith.constant dense<0.000000e+00> : vector<2xf32>
    %162 = vector.multi_reduction <add>, %161, %cst_25 [1] : vector<2x32xf32> to vector<2xf32>
    %163 = vector.shape_cast %162 : vector<2xf32> to vector<2x1xf32>
    %164 = arith.mulf %46, %160 : vector<2x32xf32>
    %cst_26 = arith.constant dense<0.000000e+00> : vector<2xf32>
    %165 = vector.multi_reduction <add>, %164, %cst_26 [1] : vector<2x32xf32> to vector<2xf32>
    %166 = vector.shape_cast %165 : vector<2xf32> to vector<2x1xf32>
    %167 = arith.mulf %65, %160 : vector<2x32xf32>
    %cst_27 = arith.constant dense<0.000000e+00> : vector<2xf32>
    %168 = vector.multi_reduction <add>, %167, %cst_27 [1] : vector<2x32xf32> to vector<2xf32>
    %169 = vector.shape_cast %168 : vector<2xf32> to vector<2x1xf32>
    %170 = arith.mulf %84, %160 : vector<2x32xf32>
    %cst_28 = arith.constant dense<0.000000e+00> : vector<2xf32>
    %171 = vector.multi_reduction <add>, %170, %cst_28 [1] : vector<2x32xf32> to vector<2xf32>
    %172 = vector.shape_cast %171 : vector<2xf32> to vector<2x1xf32>
    %173 = arith.mulf %103, %160 : vector<2x32xf32>
    %cst_29 = arith.constant dense<0.000000e+00> : vector<2xf32>
    %174 = vector.multi_reduction <add>, %173, %cst_29 [1] : vector<2x32xf32> to vector<2xf32>
    %175 = vector.shape_cast %174 : vector<2xf32> to vector<2x1xf32>
    %176 = arith.mulf %122, %160 : vector<2x32xf32>
    %cst_30 = arith.constant dense<0.000000e+00> : vector<2xf32>
    %177 = vector.multi_reduction <add>, %176, %cst_30 [1] : vector<2x32xf32> to vector<2xf32>
    %178 = vector.shape_cast %177 : vector<2xf32> to vector<2x1xf32>
    %179 = arith.mulf %141, %160 : vector<2x32xf32>
    %cst_31 = arith.constant dense<0.000000e+00> : vector<2xf32>
    %180 = vector.multi_reduction <add>, %179, %cst_31 [1] : vector<2x32xf32> to vector<2xf32>
    %181 = vector.shape_cast %180 : vector<2xf32> to vector<2x1xf32>
    %182 = arith.mulf %160, %160 : vector<2x32xf32>
    %cst_32 = arith.constant dense<0.000000e+00> : vector<2xf32>
    %183 = vector.multi_reduction <add>, %182, %cst_32 [1] : vector<2x32xf32> to vector<2xf32>
    %184 = vector.shape_cast %183 : vector<2xf32> to vector<2x1xf32>
    %185 = arith.maximumf %163, %166 : vector<2x1xf32>
    %186 = arith.maximumf %185, %169 : vector<2x1xf32>
    %187 = arith.maximumf %186, %172 : vector<2x1xf32>
    %188 = arith.maximumf %187, %175 : vector<2x1xf32>
    %189 = arith.maximumf %188, %178 : vector<2x1xf32>
    %190 = arith.maximumf %189, %181 : vector<2x1xf32>
    %191 = arith.maximumf %190, %184 : vector<2x1xf32>
    %192 = arith.subf %163, %191 : vector<2x1xf32>
    %193 = math.exp %192 : vector<2x1xf32>
    %194 = arith.subf %166, %191 : vector<2x1xf32>
    %195 = math.exp %194 : vector<2x1xf32>
    %196 = arith.subf %169, %191 : vector<2x1xf32>
    %197 = math.exp %196 : vector<2x1xf32>
    %198 = arith.subf %172, %191 : vector<2x1xf32>
    %199 = math.exp %198 : vector<2x1xf32>
    %200 = arith.subf %175, %191 : vector<2x1xf32>
    %201 = math.exp %200 : vector<2x1xf32>
    %202 = arith.subf %178, %191 : vector<2x1xf32>
    %203 = math.exp %202 : vector<2x1xf32>
    %204 = arith.subf %181, %191 : vector<2x1xf32>
    %205 = math.exp %204 : vector<2x1xf32>
    %206 = arith.subf %184, %191 : vector<2x1xf32>
    %207 = math.exp %206 : vector<2x1xf32>
    %208 = arith.addf %193, %195 : vector<2x1xf32>
    %209 = arith.addf %208, %197 : vector<2x1xf32>
    %210 = arith.addf %209, %199 : vector<2x1xf32>
    %211 = arith.addf %210, %201 : vector<2x1xf32>
    %212 = arith.addf %211, %203 : vector<2x1xf32>
    %213 = arith.addf %212, %205 : vector<2x1xf32>
    %214 = arith.addf %213, %207 : vector<2x1xf32>
    %215 = vector.broadcast %193 : vector<2x1xf32> to vector<2x32xf32>
    %216 = arith.mulf %215, %27 : vector<2x32xf32>
    %217 = vector.broadcast %195 : vector<2x1xf32> to vector<2x32xf32>
    %218 = arith.mulf %217, %46 : vector<2x32xf32>
    %219 = arith.addf %216, %218 : vector<2x32xf32>
    %220 = vector.broadcast %197 : vector<2x1xf32> to vector<2x32xf32>
    %221 = arith.mulf %220, %65 : vector<2x32xf32>
    %222 = arith.addf %219, %221 : vector<2x32xf32>
    %223 = vector.broadcast %199 : vector<2x1xf32> to vector<2x32xf32>
    %224 = arith.mulf %223, %84 : vector<2x32xf32>
    %225 = arith.addf %222, %224 : vector<2x32xf32>
    %226 = vector.broadcast %201 : vector<2x1xf32> to vector<2x32xf32>
    %227 = arith.mulf %226, %103 : vector<2x32xf32>
    %228 = arith.addf %225, %227 : vector<2x32xf32>
    %229 = vector.broadcast %203 : vector<2x1xf32> to vector<2x32xf32>
    %230 = arith.mulf %229, %122 : vector<2x32xf32>
    %231 = arith.addf %228, %230 : vector<2x32xf32>
    %232 = vector.broadcast %205 : vector<2x1xf32> to vector<2x32xf32>
    %233 = arith.mulf %232, %141 : vector<2x32xf32>
    %234 = arith.addf %231, %233 : vector<2x32xf32>
    %235 = vector.broadcast %207 : vector<2x1xf32> to vector<2x32xf32>
    %236 = arith.mulf %235, %160 : vector<2x32xf32>
    %237 = arith.addf %234, %236 : vector<2x32xf32>
    %238 = vector.broadcast %214 : vector<2x1xf32> to vector<2x32xf32>
    %239 = arith.divf %237, %238 : vector<2x32xf32>
    %c0_33 = arith.constant 0 : index
    %c0_34 = arith.constant 0 : index
    %240 = vector.load %arg4[%c0_33, %c0_34] : memref<32x2xf32, #tpu.memory_space<vmem>>, vector<32x2xf32>
    %cst_35 = arith.constant dense<0.000000e+00> : vector<2x2xf32>
    %241 = tpu.matmul %239, %240, %cst_35 {dimension_numbers = #tpu.dot_dimension_numbers<[1], [0], [0], [1], [0, 0, 1, 1], [], []>} : vector<2x32xf32>, vector<32x2xf32>, vector<2x2xf32> -> vector<2x2xf32>
    %c0_36 = arith.constant 0 : index
    %c0_37 = arith.constant 0 : index
    %242 = vector.load %arg5[%c0_36, %c0_37] : memref<1x2xf32, #tpu.memory_space<vmem>>, vector<1x2xf32>
    %243 = vector.broadcast %242 : vector<1x2xf32> to vector<2x2xf32>
    %244 = arith.addf %241, %243 : vector<2x2xf32>
    %cst_38 = arith.constant dense<0xFF800000> : vector<2xf32>
    %245 = vector.multi_reduction <maximumf>, %244, %cst_38 [1] : vector<2x2xf32> to vector<2xf32>
    %246 = vector.shape_cast %245 : vector<2xf32> to vector<2x1xf32>
    %247 = vector.broadcast %246 : vector<2x1xf32> to vector<2x2xf32>
    %248 = arith.subf %244, %247 : vector<2x2xf32>
    %249 = math.exp %248 : vector<2x2xf32>
    %cst_39 = arith.constant dense<0.000000e+00> : vector<2xf32>
    %250 = vector.multi_reduction <add>, %249, %cst_39 [1] : vector<2x2xf32> to vector<2xf32>
    %251 = vector.shape_cast %250 : vector<2xf32> to vector<2x1xf32>
    %252 = math.log %251 : vector<2x1xf32>
    %253 = arith.addf %252, %246 : vector<2x1xf32>
    %254 = vector.broadcast %253 : vector<2x1xf32> to vector<2x2xf32>
    %255 = arith.subf %244, %254 : vector<2x2xf32>
    %c0_40 = arith.constant 0 : index
    %c0_41 = arith.constant 0 : index
    %256 = vector.load %arg6[%c0_40, %c0_41] : memref<2x2xf32, #tpu.memory_space<vmem>>, vector<2x2xf32>
    tpu.vector_store %arg6[%c0_40, %c0_41], %255 {strides = array<i32>} : memref<2x2xf32, #tpu.memory_space<vmem>>, vector<2x2xf32>,
    return
  }
}

</mosaic_0001>

<llo_original>
// kernel: attention_lstm_forward.1
$region0: #{attention_lstm_forward.1}
  #allocation0 [shape = 'u32[]', space=smem, size = 0x4, offset = 0x4, fixed_abs, tag = 'smem constant byte address 0x4 - core index']
  #allocation1 [shape = 'u32[72,128]{1,0:T(1,128)}', space=vmem, size = 0x9000, scoped, tag = 'internal scratch']
  %s0 = inlined_call_operand.vmem [shape: f32[16,32], index: 0, kind: input, shape index: {}]
  %s1 = inlined_call_operand.vmem [shape: f32[32,128], index: 1, kind: input, shape index: {}]
  %s2 = inlined_call_operand.vmem [shape: f32[32,128], index: 2, kind: input, shape index: {}]
  %s3 = inlined_call_operand.vmem [shape: f32[1,128], index: 3, kind: input, shape index: {}]
  %s4 = inlined_call_operand.vmem [shape: f32[32,2], index: 4, kind: input, shape index: {}]
  %s5 = inlined_call_operand.vmem [shape: f32[1,2], index: 5, kind: input, shape index: {}]
  %s6 = inlined_call_operand.hbm [shape: f32[2,2], index: 6, kind: output, shape index: {}]
  %s7 = sld [smem:[#allocation0]]
  $region34: #{attention_lstm_forward.1} parent=0
    _
  %s9 = ssub.s32 1, %s7
  %s10 = scalar_select 0, %s9, %s7
  $region1: #{attention_lstm_forward.1} parent=0
    #allocation2 [shape = 'u8[1024]{0}', space=vmem, size = 0x400, scoped, tag = 'output window, operand 0, single buffered']
    #allocation3 [shape = 's32[1]{0}', space=sflag, size = 0x4, scoped, tag = 'scoped memory for attention_lstm_forward.1']
    %11 = vsyncpa [#allocation3], 0
    // Predicated region
    $region2: #{attention_lstm_forward.1} parent=1 // pred_check
      _
    $region3: #{attention_lstm_forward.1} parent=1 // pred_check_branch
      %13 = sbr.rel (0) target = $region5
    $region4: #{attention_lstm_forward.1} parent=1 // pred_region
      _
    $region5: #{attention_lstm_forward.1} parent=1 // pred_fallthru
      _
    // Predicated region
    $region6: #{attention_lstm_forward.1} parent=1 // pred_check
      _
    $region7: #{attention_lstm_forward.1} parent=1 // pred_check_branch
      %15 = sbr.rel (0) target = $region9
    $region8: #{attention_lstm_forward.1} parent=1 // pred_region
      _
    $region9: #{attention_lstm_forward.1} parent=1 // pred_fallthru
      _
    // Predicated region
    $region10: #{attention_lstm_forward.1} parent=1 // pred_check
      _
    $region11: #{attention_lstm_forward.1} parent=1 // pred_check_branch
      %17 = sbr.rel (0) target = $region13
    $region12: #{attention_lstm_forward.1} parent=1 // pred_region
      _
    $region13: #{attention_lstm_forward.1} parent=1 // pred_fallthru
      _
    // Predicated region
    $region14: #{attention_lstm_forward.1} parent=1 // pred_check
      _
    $region15: #{attention_lstm_forward.1} parent=1 // pred_check_branch
      %19 = sbr.rel (0) target = $region17
    $region16: #{attention_lstm_forward.1} parent=1 // pred_region
      _
    $region17: #{attention_lstm_forward.1} parent=1 // pred_fallthru
      _
    // Predicated region
    $region18: #{attention_lstm_forward.1} parent=1 // pred_check
      _
    $region19: #{attention_lstm_forward.1} parent=1 // pred_check_branch
      %21 = sbr.rel (0) target = $region21
    $region20: #{attention_lstm_forward.1} parent=1 // pred_region
      _
    $region21: #{attention_lstm_forward.1} parent=1 // pred_fallthru
      _
    // Predicated region
    $region22: #{attention_lstm_forward.1} parent=1 // pred_check
      _
    $region23: #{attention_lstm_forward.1} parent=1 // pred_check_branch
      %23 = sbr.rel (0) target = $region25
    $region24: #{attention_lstm_forward.1} parent=1 // pred_region
      _
    $region25: #{attention_lstm_forward.1} parent=1 // pred_fallthru
      _
    %v24 = vld [vmem:[%s0] sm:$0xff]
    %v25 = vld [vmem:[%s0 + $0x8] sm:$0xff]
    %v26 = vld [vmem:[%s1] sm:$0xff]
    %v27 = vld [vmem:[%s1 + $0x8] sm:$0xff]
    %v28 = vld [vmem:[%s1 + $0x10] sm:$0xff]
    %v29 = vld [vmem:[%s1 + $0x18] sm:$0xff]
    %v30 = vld [vmem:[%s3] sm:$0x1]
    %v32 = vperm.slane %v30, 0
    %vm34 = vcmask 261120
    %v36 = vsel %vm34, %v24, 0
    %v39 = vsel %vm34, %v25, 0
    %41 = vmatpush.msra.mxu0 0.0
    %42 = vmatpush.msra.mxu0 0.0
    %43 = vmatpush.msra.mxu0 0.0
    %44 = vmatpush.msra.mxu0 0.0
    %45 = vmatpush.msra.mxu0 0.0
    %46 = vmatpush.msra.mxu0 0.0
    %47 = vmatpush.msra.mxu0 0.0
    %48 = vmatpush.msra.mxu0 0.0
    %49 = vmatpush.msra.mxu0 0.0
    %50 = vmatpush.msra.mxu0 0.0
    %51 = vmatpush.msra.mxu0 0.0
    %52 = vmatpush.msra.mxu0 0.0
    %53 = vmatpush.msra.mxu0 %v29
    %54 = vmatpush.msra.mxu0 %v28
    %55 = vmatpush.msra.mxu0 %v27
    %56 = vmatpush.msra.mxu0 %v26
    %57 = vmatmul.f32.gmra.mxu0 %v36
    %v58 = vpop.f32.mrf.mxu0
    %v59 = vadd.f32 %v32, %v58
    %60 = vmatmul.f32.gmra.mxu0 %v39
    %v61 = vpop.f32.mrf.mxu0
    %v62 = vadd.f32 %v32, %v61
    %63 = vdwg.mxu0
    %v64 = vld [vmem:[%s2] sm:$0xff]
    %v65 = vld [vmem:[%s2 + $0x8] sm:$0xff]
    %v66 = vld [vmem:[%s2 + $0x10] sm:$0xff]
    %v67 = vld [vmem:[%s2 + $0x18] sm:$0xff]
    %v69 = vsel %vm34, 0.0, 0
    %71 = vmatpush.msra.mxu0 0.0
    %72 = vmatpush.msra.mxu0 0.0
    %73 = vmatpush.msra.mxu0 0.0
    %74 = vmatpush.msra.mxu0 0.0
    %75 = vmatpush.msra.mxu0 0.0
    %76 = vmatpush.msra.mxu0 0.0
    %77 = vmatpush.msra.mxu0 0.0
    %78 = vmatpush.msra.mxu0 0.0
    %79 = vmatpush.msra.mxu0 0.0
    %80 = vmatpush.msra.mxu0 0.0
    %81 = vmatpush.msra.mxu0 0.0
    %82 = vmatpush.msra.mxu0 0.0
    %83 = vmatpush.msra.mxu0 %v67
    %84 = vmatpush.msra.mxu0 %v66
    %85 = vmatpush.msra.mxu0 %v65
    %86 = vmatpush.msra.mxu0 %v64
    %87 = vmatmul.f32.gmra.mxu0 %v69
    %v88 = vpop.f32.mrf.mxu0
    %v89 = vadd.f32 0.0, %v88
    %90 = vdwg.mxu0
    %v91 = vadd.f32 %v59, %v89
    %v92 = vxor.u32 %v91, 2147483648
    %v93 = vmul.f32 %v92, 1.442695
    %v94 = vpow.pop %v93
    %v95 = vadd.f32 %v94, 1.0
    %v96 = vrcp.pop %v95
    %v97 = vmul.f32 %v95, %v96
    %v98 = vsub.f32 1.0, %v97
    %v99 = vmul.f32 %v96, %v98
    %v100 = vadd.f32 %v96, %v99
    %vm101 = vweird.f32 %v95
    %vm102 = vweird.f32 %v96
    %vm103 = vmor %vm101, %vm102
    %v104 = vsel %vm103, %v96, %v100
    %v105 = vand.u32 2147483647, %v95
    %vm106 = vcmp.eq.f32.partialorder %v105, 8.507059e+37
    %v107 = vand.u32 %v95, 2147483648
    %v108 = vor.u32 1.1754944e-38, %v107
    %v109 = vsel %vm106, %v108, %v104
    %v110 = vmul.f32 1.0, %v109
    %v111 = vtanh.pop %v91
    %v112 = vmul.f32 %v110, 0.0
    %114 = vrot.lane.b32.xlu0 %v111, 32
    %v115 = vpop.permute.xlu0 %114
    %v117 = vmul.f32 %v110, %v115
    %119 = vrot.lane.b32.xlu0 %v117, 32
    %v120 = vpop.permute.xlu0 %119
    %v122 = vadd.f32 %v112, %v120
    %v123 = vtanh.pop %v122
    %125 = vrot.lane.b32.xlu0 %v123, 32
    %v126 = vpop.permute.xlu0 %125
    %v128 = vmul.f32 %v110, %v126
    %130 = vrot.lane.b32.xlu0 %v128, 64
    %v131 = vpop.permute.xlu0 %130
    %v132 = vsel %vm34, %v131, 0
    %134 = vmatpush.msra.mxu0 0.0
    %135 = vmatpush.msra.mxu0 0.0
    %136 = vmatpush.msra.mxu0 0.0
    %137 = vmatpush.msra.mxu0 0.0
    %138 = vmatpush.msra.mxu0 0.0
    %139 = vmatpush.msra.mxu0 0.0
    %140 = vmatpush.msra.mxu0 0.0
    %141 = vmatpush.msra.mxu0 0.0
    %142 = vmatpush.msra.mxu0 0.0
    %143 = vmatpush.msra.mxu0 0.0
    %144 = vmatpush.msra.mxu0 0.0
    %145 = vmatpush.msra.mxu0 0.0
    %146 = vmatpush.msra.mxu0 %v67
    %147 = vmatpush.msra.mxu0 %v66
    %148 = vmatpush.msra.mxu0 %v65
    %149 = vmatpush.msra.mxu0 %v64
    %150 = vmatmul.f32.gmra.mxu0 %v132
    %v151 = vpop.f32.mrf.mxu0
    %v152 = vadd.f32 0.0, %v151
    %153 = vdwg.mxu0
    %v155 = vrot.slane %v152, 6
    %v157 = vadd.f32 %v59, %v155
    %v158 = vxor.u32 %v157, 2147483648
    %v159 = vmul.f32 %v158, 1.442695
    %v160 = vpow.pop %v159
    %v161 = vadd.f32 %v160, 1.0
    %v162 = vrcp.pop %v161
    %v163 = vmul.f32 %v161, %v162
    %v164 = vsub.f32 1.0, %v163
    %v165 = vmul.f32 %v162, %v164
    %v166 = vadd.f32 %v162, %v165
    %vm167 = vweird.f32 %v161
    %vm168 = vweird.f32 %v162
    %vm169 = vmor %vm167, %vm168
    %v170 = vsel %vm169, %v162, %v166
    %v171 = vand.u32 2147483647, %v161
    %vm172 = vcmp.eq.f32.partialorder %v171, 8.507059e+37
    %v173 = vand.u32 %v161, 2147483648
    %v174 = vor.u32 1.1754944e-38, %v173
    %v175 = vsel %vm172, %v174, %v170
    %v176 = vmul.f32 1.0, %v175
    %v177 = vtanh.pop %v157
    %v179 = vrot.slane %v122, 6
    %v181 = vmul.f32 %v176, %v179
    %183 = vrot.lane.b32.xlu0 %v177, 32
    %v184 = vpop.permute.xlu0 %183
    %v186 = vmul.f32 %v176, %v184
    %188 = vrot.lane.b32.xlu0 %v186, 32
    %v189 = vpop.permute.xlu0 %188
    %v191 = vadd.f32 %v181, %v189
    %v192 = vtanh.pop %v191
    %194 = vrot.lane.b32.xlu0 %v192, 32
    %v195 = vpop.permute.xlu0 %194
    %v197 = vmul.f32 %v176, %v195
    %v199 = vrot.slane %v197, 2
    %200 = vrot.lane.b32.xlu0 %v199, 64
    %v201 = vpop.permute.xlu0 %200
    %v202 = vsel %vm34, %v201, 0
    %204 = vmatpush.msra.mxu0 0.0
    %205 = vmatpush.msra.mxu0 0.0
    %206 = vmatpush.msra.mxu0 0.0
    %207 = vmatpush.msra.mxu0 0.0
    %208 = vmatpush.msra.mxu0 0.0
    %209 = vmatpush.msra.mxu0 0.0
    %210 = vmatpush.msra.mxu0 0.0
    %211 = vmatpush.msra.mxu0 0.0
    %212 = vmatpush.msra.mxu0 0.0
    %213 = vmatpush.msra.mxu0 0.0
    %214 = vmatpush.msra.mxu0 0.0
    %215 = vmatpush.msra.mxu0 0.0
    %216 = vmatpush.msra.mxu0 %v67
    %217 = vmatpush.msra.mxu0 %v66
    %218 = vmatpush.msra.mxu0 %v65
    %219 = vmatpush.msra.mxu0 %v64
    %220 = vmatmul.f32.gmra.mxu0 %v202
    %v221 = vpop.f32.mrf.mxu0
    %v222 = vadd.f32 0.0, %v221
    %223 = vdwg.mxu0
    %v225 = vrot.slane %v222, 4
    %v227 = vadd.f32 %v59, %v225
    %v228 = vxor.u32 %v227, 2147483648
    %v229 = vmul.f32 %v228, 1.442695
    %v230 = vpow.pop %v229
    %v231 = vadd.f32 %v230, 1.0
    %v232 = vrcp.pop %v231
    %v233 = vmul.f32 %v231, %v232
    %v234 = vsub.f32 1.0, %v233
    %v235 = vmul.f32 %v232, %v234
    %v236 = vadd.f32 %v232, %v235
    %vm237 = vweird.f32 %v231
    %vm238 = vweird.f32 %v232
    %vm239 = vmor %vm237, %vm238
    %v240 = vsel %vm239, %v232, %v236
    %v241 = vand.u32 2147483647, %v231
    %vm242 = vcmp.eq.f32.partialorder %v241, 8.507059e+37
    %v243 = vand.u32 %v231, 2147483648
    %v244 = vor.u32 1.1754944e-38, %v243
    %v245 = vsel %vm242, %v244, %v240
    %v246 = vmul.f32 1.0, %v245
    %v247 = vtanh.pop %v227
    %v249 = vrot.slane %v191, 6
    %v251 = vmul.f32 %v246, %v249
    %253 = vrot.lane.b32.xlu0 %v247, 32
    %v254 = vpop.permute.xlu0 %253
    %v256 = vmul.f32 %v246, %v254
    %258 = vrot.lane.b32.xlu0 %v256, 32
    %v259 = vpop.permute.xlu0 %258
    %v261 = vadd.f32 %v251, %v259
    %v262 = vtanh.pop %v261
    %264 = vrot.lane.b32.xlu0 %v262, 32
    %v265 = vpop.permute.xlu0 %264
    %v267 = vmul.f32 %v246, %v265
    %v269 = vrot.slane %v267, 4
    %270 = vrot.lane.b32.xlu0 %v269, 64
    %v271 = vpop.permute.xlu0 %270
    %v272 = vsel %vm34, %v271, 0
    %274 = vmatpush.msra.mxu0 0.0
    %275 = vmatpush.msra.mxu0 0.0
    %276 = vmatpush.msra.mxu0 0.0
    %277 = vmatpush.msra.mxu0 0.0
    %278 = vmatpush.msra.mxu0 0.0
    %279 = vmatpush.msra.mxu0 0.0
    %280 = vmatpush.msra.mxu0 0.0
    %281 = vmatpush.msra.mxu0 0.0
    %282 = vmatpush.msra.mxu0 0.0
    %283 = vmatpush.msra.mxu0 0.0
    %284 = vmatpush.msra.mxu0 0.0
    %285 = vmatpush.msra.mxu0 0.0
    %286 = vmatpush.msra.mxu0 %v67
    %287 = vmatpush.msra.mxu0 %v66
    %288 = vmatpush.msra.mxu0 %v65
    %289 = vmatpush.msra.mxu0 %v64
    %290 = vmatmul.f32.gmra.mxu0 %v272
    %v291 = vpop.f32.mrf.mxu0
    %v292 = vadd.f32 0.0, %v291
    %293 = vdwg.mxu0
    %v295 = vrot.slane %v292, 2
    %v297 = vadd.f32 %v59, %v295
    %v298 = vxor.u32 %v297, 2147483648
    %v299 = vmul.f32 %v298, 1.442695
    %v300 = vpow.pop %v299
    %v301 = vadd.f32 %v300, 1.0
    %v302 = vrcp.pop %v301
    %v303 = vmul.f32 %v301, %v302
    %v304 = vsub.f32 1.0, %v303
    %v305 = vmul.f32 %v302, %v304
    %v306 = vadd.f32 %v302, %v305
    %vm307 = vweird.f32 %v301
    %vm308 = vweird.f32 %v302
    %vm309 = vmor %vm307, %vm308
    %v310 = vsel %vm309, %v302, %v306
    %v311 = vand.u32 2147483647, %v301
    %vm312 = vcmp.eq.f32.partialorder %v311, 8.507059e+37
    %v313 = vand.u32 %v301, 2147483648
    %v314 = vor.u32 1.1754944e-38, %v313
    %v315 = vsel %vm312, %v314, %v310
    %v316 = vmul.f32 1.0, %v315
    %v317 = vtanh.pop %v297
    %v319 = vrot.slane %v261, 6
    %v321 = vmul.f32 %v316, %v319
    %323 = vrot.lane.b32.xlu0 %v317, 32
    %v324 = vpop.permute.xlu0 %323
    %v326 = vmul.f32 %v316, %v324
    %328 = vrot.lane.b32.xlu0 %v326, 32
    %v329 = vpop.permute.xlu0 %328
    %v331 = vadd.f32 %v321, %v329
    %v332 = vtanh.pop %v331
    %334 = vrot.lane.b32.xlu0 %v332, 32
    %v335 = vpop.permute.xlu0 %334
    %v337 = vmul.f32 %v316, %v335
    %v339 = vrot.slane %v337, 6
    %340 = vrot.lane.b32.xlu0 %v339, 64
    %v341 = vpop.permute.xlu0 %340
    %v342 = vsel %vm34, %v341, 0
    %344 = vmatpush.msra.mxu0 0.0
    %345 = vmatpush.msra.mxu0 0.0
    %346 = vmatpush.msra.mxu0 0.0
    %347 = vmatpush.msra.mxu0 0.0
    %348 = vmatpush.msra.mxu0 0.0
    %349 = vmatpush.msra.mxu0 0.0
    %350 = vmatpush.msra.mxu0 0.0
    %351 = vmatpush.msra.mxu0 0.0
    %352 = vmatpush.msra.mxu0 0.0
    %353 = vmatpush.msra.mxu0 0.0
    %354 = vmatpush.msra.mxu0 0.0
    %355 = vmatpush.msra.mxu0 0.0
    %356 = vmatpush.msra.mxu0 %v67
    %357 = vmatpush.msra.mxu0 %v66
    %358 = vmatpush.msra.mxu0 %v65
    %359 = vmatpush.msra.mxu0 %v64
    %360 = vmatmul.f32.gmra.mxu0 %v342
    %v361 = vpop.f32.mrf.mxu0
    %v362 = vadd.f32 0.0, %v361
    %363 = vdwg.mxu0
    %v364 = vadd.f32 %v62, %v362
    %v365 = vxor.u32 %v364, 2147483648
    %v366 = vmul.f32 %v365, 1.442695
    %v367 = vpow.pop %v366
    %v368 = vadd.f32 %v367, 1.0
    %v369 = vrcp.pop %v368
    %v370 = vmul.f32 %v368, %v369
    %v371 = vsub.f32 1.0, %v370
    %v372 = vmul.f32 %v369, %v371
    %v373 = vadd.f32 %v369, %v372
    %vm374 = vweird.f32 %v368
    %vm375 = vweird.f32 %v369
    %vm376 = vmor %vm374, %vm375
    %v377 = vsel %vm376, %v369, %v373
    %v378 = vand.u32 2147483647, %v368
    %vm379 = vcmp.eq.f32.partialorder %v378, 8.507059e+37
    %v380 = vand.u32 %v368, 2147483648
    %v381 = vor.u32 1.1754944e-38, %v380
    %v382 = vsel %vm379, %v381, %v377
    %v383 = vmul.f32 1.0, %v382
    %v384 = vtanh.pop %v364
    %v386 = vrot.slane %v331, 6
    %v388 = vmul.f32 %v383, %v386
    %390 = vrot.lane.b32.xlu0 %v384, 32
    %v391 = vpop.permute.xlu0 %390
    %v393 = vmul.f32 %v383, %v391
    %395 = vrot.lane.b32.xlu0 %v393, 32
    %v396 = vpop.permute.xlu0 %395
    %v398 = vadd.f32 %v388, %v396
    %v399 = vtanh.pop %v398
    %401 = vrot.lane.b32.xlu0 %v399, 32
    %v402 = vpop.permute.xlu0 %401
    %v404 = vmul.f32 %v383, %v402
    %406 = vrot.lane.b32.xlu0 %v404, 64
    %v407 = vpop.permute.xlu0 %406
    %v408 = vsel %vm34, %v407, 0
    %410 = vmatpush.msra.mxu0 0.0
    %411 = vmatpush.msra.mxu0 0.0
    %412 = vmatpush.msra.mxu0 0.0
    %413 = vmatpush.msra.mxu0 0.0
    %414 = vmatpush.msra.mxu0 0.0
    %415 = vmatpush.msra.mxu0 0.0
    %416 = vmatpush.msra.mxu0 0.0
    %417 = vmatpush.msra.mxu0 0.0
    %418 = vmatpush.msra.mxu0 0.0
    %419 = vmatpush.msra.mxu0 0.0
    %420 = vmatpush.msra.mxu0 0.0
    %421 = vmatpush.msra.mxu0 0.0
    %422 = vmatpush.msra.mxu0 %v67
    %423 = vmatpush.msra.mxu0 %v66
    %424 = vmatpush.msra.mxu0 %v65
    %425 = vmatpush.msra.mxu0 %v64
    %426 = vmatmul.f32.gmra.mxu0 %v408
    %v427 = vpop.f32.mrf.mxu0
    %v428 = vadd.f32 0.0, %v427
    %429 = vdwg.mxu0
    %v431 = vrot.slane %v428, 6
    %v433 = vadd.f32 %v62, %v431
    %v434 = vxor.u32 %v433, 2147483648
    %v435 = vmul.f32 %v434, 1.442695
    %v436 = vpow.pop %v435
    %v437 = vadd.f32 %v436, 1.0
    %v438 = vrcp.pop %v437
    %v439 = vmul.f32 %v437, %v438
    %v440 = vsub.f32 1.0, %v439
    %v441 = vmul.f32 %v438, %v440
    %v442 = vadd.f32 %v438, %v441
    %vm443 = vweird.f32 %v437
    %vm444 = vweird.f32 %v438
    %vm445 = vmor %vm443, %vm444
    %v446 = vsel %vm445, %v438, %v442
    %v447 = vand.u32 2147483647, %v437
    %vm448 = vcmp.eq.f32.partialorder %v447, 8.507059e+37
    %v449 = vand.u32 %v437, 2147483648
    %v450 = vor.u32 1.1754944e-38, %v449
    %v451 = vsel %vm448, %v450, %v446
    %v452 = vmul.f32 1.0, %v451
    %v453 = vtanh.pop %v433
    %v455 = vrot.slane %v398, 6
    %v457 = vmul.f32 %v452, %v455
    %459 = vrot.lane.b32.xlu0 %v453, 32
    %v460 = vpop.permute.xlu0 %459
    %v462 = vmul.f32 %v452, %v460
    %464 = vrot.lane.b32.xlu0 %v462, 32
    %v465 = vpop.permute.xlu0 %464
    %v467 = vadd.f32 %v457, %v465
    %v468 = vtanh.pop %v467
    %470 = vrot.lane.b32.xlu0 %v468, 32
    %v471 = vpop.permute.xlu0 %470
    %v473 = vmul.f32 %v452, %v471
    %v475 = vrot.slane %v473, 2
    %476 = vrot.lane.b32.xlu0 %v475, 64
    %v477 = vpop.permute.xlu0 %476
    %v478 = vsel %vm34, %v477, 0
    %480 = vmatpush.msra.mxu0 0.0
    %481 = vmatpush.msra.mxu0 0.0
    %482 = vmatpush.msra.mxu0 0.0
    %483 = vmatpush.msra.mxu0 0.0
    %484 = vmatpush.msra.mxu0 0.0
    %485 = vmatpush.msra.mxu0 0.0
    %486 = vmatpush.msra.mxu0 0.0
    %487 = vmatpush.msra.mxu0 0.0
    %488 = vmatpush.msra.mxu0 0.0
    %489 = vmatpush.msra.mxu0 0.0
    %490 = vmatpush.msra.mxu0 0.0
    %491 = vmatpush.msra.mxu0 0.0
    %492 = vmatpush.msra.mxu0 %v67
    %493 = vmatpush.msra.mxu0 %v66
    %494 = vmatpush.msra.mxu0 %v65
    %495 = vmatpush.msra.mxu0 %v64
    %496 = vmatmul.f32.gmra.mxu0 %v478
    %v497 = vpop.f32.mrf.mxu0
    %v498 = vadd.f32 0.0, %v497
    %499 = vdwg.mxu0
    %v501 = vrot.slane %v498, 4
    %v503 = vadd.f32 %v62, %v501
    %v504 = vxor.u32 %v503, 2147483648
    %v505 = vmul.f32 %v504, 1.442695
    %v506 = vpow.pop %v505
    %v507 = vadd.f32 %v506, 1.0
    %v508 = vrcp.pop %v507
    %v509 = vmul.f32 %v507, %v508
    %v510 = vsub.f32 1.0, %v509
    %v511 = vmul.f32 %v508, %v510
    %v512 = vadd.f32 %v508, %v511
    %vm513 = vweird.f32 %v507
    %vm514 = vweird.f32 %v508
    %vm515 = vmor %vm513, %vm514
    %v516 = vsel %vm515, %v508, %v512
    %v517 = vand.u32 2147483647, %v507
    %vm518 = vcmp.eq.f32.partialorder %v517, 8.507059e+37
    %v519 = vand.u32 %v507, 2147483648
    %v520 = vor.u32 1.1754944e-38, %v519
    %v521 = vsel %vm518, %v520, %v516
    %v522 = vmul.f32 1.0, %v521
    %v523 = vtanh.pop %v503
    %v525 = vrot.slane %v467, 6
    %v527 = vmul.f32 %v522, %v525
    %529 = vrot.lane.b32.xlu0 %v523, 32
    %v530 = vpop.permute.xlu0 %529
    %v532 = vmul.f32 %v522, %v530
    %534 = vrot.lane.b32.xlu0 %v532, 32
    %v535 = vpop.permute.xlu0 %534
    %v537 = vadd.f32 %v527, %v535
    %v538 = vtanh.pop %v537
    %540 = vrot.lane.b32.xlu0 %v538, 32
    %v541 = vpop.permute.xlu0 %540
    %v543 = vmul.f32 %v522, %v541
    %v545 = vrot.slane %v543, 4
    %546 = vrot.lane.b32.xlu0 %v545, 64
    %v547 = vpop.permute.xlu0 %546
    %v548 = vsel %vm34, %v547, 0
    %550 = vmatpush.msra.mxu0 0.0
    %551 = vmatpush.msra.mxu0 0.0
    %552 = vmatpush.msra.mxu0 0.0
    %553 = vmatpush.msra.mxu0 0.0
    %554 = vmatpush.msra.mxu0 0.0
    %555 = vmatpush.msra.mxu0 0.0
    %556 = vmatpush.msra.mxu0 0.0
    %557 = vmatpush.msra.mxu0 0.0
    %558 = vmatpush.msra.mxu0 0.0
    %559 = vmatpush.msra.mxu0 0.0
    %560 = vmatpush.msra.mxu0 0.0
    %561 = vmatpush.msra.mxu0 0.0
    %562 = vmatpush.msra.mxu0 %v67
    %563 = vmatpush.msra.mxu0 %v66
    %564 = vmatpush.msra.mxu0 %v65
    %565 = vmatpush.msra.mxu0 %v64
    %566 = vmatmul.f32.gmra.mxu0 %v548
    %v567 = vpop.f32.mrf.mxu0
    %v568 = vadd.f32 0.0, %v567
    %569 = vdwg.mxu0
    %v571 = vrot.slane %v568, 2
    %v573 = vadd.f32 %v62, %v571
    %v574 = vxor.u32 %v573, 2147483648
    %v575 = vmul.f32 %v574, 1.442695
    %v576 = vpow.pop %v575
    %v577 = vadd.f32 %v576, 1.0
    %v578 = vrcp.pop %v577
    %v579 = vmul.f32 %v577, %v578
    %v580 = vsub.f32 1.0, %v579
    %v581 = vmul.f32 %v578, %v580
    %v582 = vadd.f32 %v578, %v581
    %vm583 = vweird.f32 %v577
    %vm584 = vweird.f32 %v578
    %vm585 = vmor %vm583, %vm584
    %v586 = vsel %vm585, %v578, %v582
    %v587 = vand.u32 2147483647, %v577
    %vm588 = vcmp.eq.f32.partialorder %v587, 8.507059e+37
    %v589 = vand.u32 %v577, 2147483648
    %v590 = vor.u32 1.1754944e-38, %v589
    %v591 = vsel %vm588, %v590, %v586
    %v592 = vmul.f32 1.0, %v591
    %v593 = vtanh.pop %v573
    %v595 = vrot.slane %v537, 6
    %v597 = vmul.f32 %v592, %v595
    %599 = vrot.lane.b32.xlu0 %v593, 32
    %v600 = vpop.permute.xlu0 %599
    %v602 = vmul.f32 %v592, %v600
    %604 = vrot.lane.b32.xlu0 %v602, 32
    %v605 = vpop.permute.xlu0 %604
    %v607 = vadd.f32 %v597, %v605
    %v608 = vtanh.pop %v607
    %610 = vrot.lane.b32.xlu0 %v608, 32
    %v611 = vpop.permute.xlu0 %610
    %v613 = vmul.f32 %v592, %v611
    %v615 = vrot.slane %v613, 6
    %v617 = vmul.f32 %v128, %v615
    %619 = vrot.lane.b32.xlu0 %v617, 64
    %v620 = vpop.permute.xlu0 %619
    %vm622 = vcmask 254976
    %v623 = vsel %vm622, %v620, 0.0
    %624 = vadd.xlane.f32.xlu0 %v623
    %v625 = vpop.xlane.xlu0 %624
    %v626 = vrot.slane %v613, 4
    %v628 = vmul.f32 %v197, %v626
    %630 = vrot.lane.b32.xlu0 %v628, 64
    %v631 = vpop.permute.xlu0 %630
    %vm633 = vcmask 257026
    %v634 = vsel %vm633, %v631, 0.0
    %635 = vadd.xlane.f32.xlu0 %v634
    %v636 = vpop.xlane.xlu0 %635
    %v637 = vrot.slane %v613, 2
    %v639 = vmul.f32 %v267, %v637
    %641 = vrot.lane.b32.xlu0 %v639, 64
    %v642 = vpop.permute.xlu0 %641
    %vm644 = vcmask 259076
    %v645 = vsel %vm644, %v642, 0.0
    %646 = vadd.xlane.f32.xlu0 %v645
    %v647 = vpop.xlane.xlu0 %646
    %v648 = vmul.f32 %v337, %v613
    %650 = vrot.lane.b32.xlu0 %v648, 64
    %v651 = vpop.permute.xlu0 %650
    %vm653 = vcmask 261126
    %v654 = vsel %vm653, %v651, 0.0
    %655 = vadd.xlane.f32.xlu0 %v654
    %v656 = vpop.xlane.xlu0 %655
    %v657 = vmul.f32 %v404, %v615
    %659 = vrot.lane.b32.xlu0 %v657, 64
    %v660 = vpop.permute.xlu0 %659
    %v662 = vsel %vm622, %v660, 0.0
    %663 = vadd.xlane.f32.xlu0 %v662
    %v664 = vpop.xlane.xlu0 %663
    %v665 = vmul.f32 %v473, %v626
    %667 = vrot.lane.b32.xlu0 %v665, 64
    %v668 = vpop.permute.xlu0 %667
    %v670 = vsel %vm633, %v668, 0.0
    %671 = vadd.xlane.f32.xlu0 %v670
    %v672 = vpop.xlane.xlu0 %671
    %v673 = vmul.f32 %v543, %v637
    %675 = vrot.lane.b32.xlu0 %v673, 64
    %v676 = vpop.permute.xlu0 %675
    %v678 = vsel %vm644, %v676, 0.0
    %679 = vadd.xlane.f32.xlu0 %v678
    %v680 = vpop.xlane.xlu0 %679
    %v681 = vmul.f32 %v613, %v613
    %683 = vrot.lane.b32.xlu0 %v681, 64
    %v684 = vpop.permute.xlu0 %683
    %v686 = vsel %vm653, %v684, 0.0
    %687 = vadd.xlane.f32.xlu0 %v686
    %v688 = vpop.xlane.xlu0 %687
    %v690 = vrot.slane %v636, 2
    %v692 = vmax.f32 %v625, %v690
    %v694 = vrot.slane %v647, 4
    %v696 = vmax.f32 %v692, %v694
    %v698 = vrot.slane %v656, 6
    %v700 = vmax.f32 %v696, %v698
    %v701 = vmax.f32 %v700, %v664
    %v703 = vrot.slane %v672, 2
    %v705 = vmax.f32 %v701, %v703
    %v707 = vrot.slane %v680, 4
    %v709 = vmax.f32 %v705, %v707
    %v711 = vrot.slane %v688, 6
    %v713 = vmax.f32 %v709, %v711
    %v714 = vsub.f32 %v625, %v713
    %v715 = vmul.f32 %v714, 1.442695
    %v716 = vpow.pop %v715
    %v718 = vrot.slane %v713, 6
    %v720 = vsub.f32 %v636, %v718
    %v721 = vmul.f32 %v720, 1.442695
    %v722 = vpow.pop %v721
    %v723 = vrot.slane %v713, 4
    %v725 = vsub.f32 %v647, %v723
    %v726 = vmul.f32 %v725, 1.442695
    %v727 = vpow.pop %v726
    %v728 = vrot.slane %v713, 2
    %v730 = vsub.f32 %v656, %v728
    %v731 = vmul.f32 %v730, 1.442695
    %v732 = vpow.pop %v731
    %v733 = vsub.f32 %v664, %v713
    %v734 = vmul.f32 %v733, 1.442695
    %v735 = vpow.pop %v734
    %v736 = vsub.f32 %v672, %v718
    %v737 = vmul.f32 %v736, 1.442695
    %v738 = vpow.pop %v737
    %v739 = vsub.f32 %v680, %v723
    %v740 = vmul.f32 %v739, 1.442695
    %v741 = vpow.pop %v740
    %v742 = vsub.f32 %v688, %v728
    %v743 = vmul.f32 %v742, 1.442695
    %v744 = vpow.pop %v743
    %v746 = vrot.slane %v722, 2
    %v748 = vadd.f32 %v716, %v746
    %v750 = vrot.slane %v727, 4
    %v752 = vadd.f32 %v748, %v750
    %v754 = vrot.slane %v732, 6
    %v756 = vadd.f32 %v752, %v754
    %v757 = vadd.f32 %v756, %v735
    %v759 = vrot.slane %v738, 2
    %v761 = vadd.f32 %v757, %v759
    %v763 = vrot.slane %v741, 4
    %v765 = vadd.f32 %v761, %v763
    %v767 = vrot.slane %v744, 6
    %v769 = vadd.f32 %v765, %v767
    %771 = vset.pattern.permute.xlu0 0
    %772 = vperm.xlu0 %771, %v716
    %v773 = vpop.permute.xlu0 %772
    %v775 = vmul.f32 %v773, %v128
    %776 = vset.pattern.permute.xlu0 0
    %777 = vperm.xlu0 %776, %v722
    %v778 = vpop.permute.xlu0 %777
    %v780 = vmul.f32 %v778, %v197
    %v782 = vrot.slane %v780, 2
    %v784 = vadd.f32 %v775, %v782
    %785 = vset.pattern.permute.xlu0 0
    %786 = vperm.xlu0 %785, %v727
    %v787 = vpop.permute.xlu0 %786
    %v789 = vmul.f32 %v787, %v267
    %v791 = vrot.slane %v789, 4
    %v793 = vadd.f32 %v784, %v791
    %794 = vset.pattern.permute.xlu0 0
    %795 = vperm.xlu0 %794, %v732
    %v796 = vpop.permute.xlu0 %795
    %v798 = vmul.f32 %v796, %v337
    %v800 = vrot.slane %v798, 6
    %v802 = vadd.f32 %v793, %v800
    %804 = vset.pattern.permute.xlu0 0
    %805 = vperm.xlu0 %804, %v735
    %v806 = vpop.permute.xlu0 %805
    %v808 = vmul.f32 %v806, %v404
    %v809 = vadd.f32 %v802, %v808
    %810 = vset.pattern.permute.xlu0 0
    %811 = vperm.xlu0 %810, %v738
    %v812 = vpop.permute.xlu0 %811
    %v814 = vmul.f32 %v812, %v473
    %v816 = vrot.slane %v814, 2
    %v818 = vadd.f32 %v809, %v816
    %819 = vset.pattern.permute.xlu0 0
    %820 = vperm.xlu0 %819, %v741
    %v821 = vpop.permute.xlu0 %820
    %v823 = vmul.f32 %v821, %v543
    %v825 = vrot.slane %v823, 4
    %v827 = vadd.f32 %v818, %v825
    %828 = vset.pattern.permute.xlu0 0
    %829 = vperm.xlu0 %828, %v744
    %v830 = vpop.permute.xlu0 %829
    %v832 = vmul.f32 %v830, %v613
    %v834 = vrot.slane %v832, 6
    %v836 = vadd.f32 %v827, %v834
    %838 = vset.pattern.permute.xlu0 0
    %839 = vperm.xlu0 %838, %v769
    %v840 = vpop.permute.xlu0 %839
    %v842 = vrcp.pop %v840
    %v843 = vmul.f32 %v840, %v842
    %v844 = vsub.f32 1.0, %v843
    %v845 = vmul.f32 %v842, %v844
    %v846 = vadd.f32 %v842, %v845
    %vm847 = vweird.f32 %v840
    %vm848 = vweird.f32 %v842
    %vm849 = vmor %vm847, %vm848
    %v850 = vsel %vm849, %v842, %v846
    %v851 = vand.u32 2147483647, %v840
    %vm852 = vcmp.eq.f32.partialorder %v851, 8.507059e+37
    %v853 = vand.u32 %v840, 2147483648
    %v854 = vor.u32 1.1754944e-38, %v853
    %v855 = vsel %vm852, %v854, %v850
    %v856 = vmul.f32 %v836, %v855
    %v857 = vld [vmem:[%s4] sm:$0xff]
    %v858 = vld [vmem:[%s4 + $0x8] sm:$0xff]
    %v859 = vld [vmem:[%s4 + $0x10] sm:$0xff]
    %v860 = vld [vmem:[%s4 + $0x18] sm:$0xff]
    %v861 = vld [vmem:[%s5] sm:$0x1]
    %v863 = vperm.slane %v861, 0
    %866 = vrot.lane.b32.xlu0 %v856, 64
    %v867 = vpop.permute.xlu0 %866
    %v868 = vsel %vm34, %v867, 0
    %870 = vmatpush.msra.mxu0 0.0
    %871 = vmatpush.msra.mxu0 0.0
    %872 = vmatpush.msra.mxu0 0.0
    %873 = vmatpush.msra.mxu0 0.0
    %874 = vmatpush.msra.mxu0 0.0
    %875 = vmatpush.msra.mxu0 0.0
    %876 = vmatpush.msra.mxu0 0.0
    %877 = vmatpush.msra.mxu0 0.0
    %878 = vmatpush.msra.mxu0 0.0
    %879 = vmatpush.msra.mxu0 0.0
    %880 = vmatpush.msra.mxu0 0.0
    %881 = vmatpush.msra.mxu0 0.0
    %882 = vmatpush.msra.mxu0 %v860
    %883 = vmatpush.msra.mxu0 %v859
    %884 = vmatpush.msra.mxu0 %v858
    %885 = vmatpush.msra.mxu0 %v857
    %886 = vmatmul.f32.gmra.mxu0 %v868
    %v887 = vpop.f32.mrf.mxu0
    %v888 = vadd.f32 %v863, %v887
    %889 = vdwg.mxu0
    %vm890 = vcmask 9216
    %v891 = vsel %vm890, %v888, -inf
    %892 = vmax.xlane.f32.xlu0 %v891
    %v893 = vpop.xlane.xlu0 %892
    %v894 = vsub.f32 %v888, %v893
    %v895 = vmul.f32 %v894, 1.442695
    %v896 = vpow.pop %v895
    %v897 = vsel %vm890, %v896, 0.0
    %898 = vadd.xlane.f32.xlu0 %v897
    %v899 = vpop.xlane.xlu0 %898
    %v900 = vlog2.pop %v899
    %v901 = vmul.f32 %v900, 0.6931472
    %v902 = vadd.f32 %v901, %v893
    %v903 = vsub.f32 %v888, %v902
    %904 = vst.msk [vmem:[#allocation2] sm:$0x3] %vm890, %v903
    // Predicated region
    $region26: #{attention_lstm_forward.1} parent=1 // pred_check
      _
    $region27: #{attention_lstm_forward.1} parent=1 // pred_check_branch
      %906 = sbr.rel (0) target = $region29
    $region28: #{attention_lstm_forward.1} parent=1 // pred_region
      %908 = vsyncadd [#allocation3], 0
      %s910 = sshll.u32 [#allocation2], 4
      %s911 = int_to_ptr.vmem [resolvable:$true] %s910
      %s912 = sshll.u32 %s6, 4
      %s913 = int_to_ptr.hbm [resolvable:$true] %s912
      %915 = dma.vmem_to_hbm [thread:$0]  %s911, 32, %s913, [#allocation3]
    $region29: #{attention_lstm_forward.1} parent=1 // pred_fallthru
      _
    // Predicated region
    $region30: #{attention_lstm_forward.1} parent=1 // pred_check
      _
    $region31: #{attention_lstm_forward.1} parent=1 // pred_check_branch
      %917 = sbr.rel (0) target = $region33
    $region32: #{attention_lstm_forward.1} parent=1 // pred_region
      %919 = dma.done [#allocation3], 32
    $region33: #{attention_lstm_forward.1} parent=1 // pred_fallthru
      _
    %920 = vsyncpa [#allocation3], 1

</llo_original>
